<compile_context>
chip_gen: v5e
topology: v5e:2x2
jax: 0.10.0
libtpu: 0.0.40
codegen_flags: <defaults>
</compile_context>

<pallas_src>
import functools

import jax
import jax.numpy as jnp
from jax.experimental import pallas as pl
from jax.experimental.pallas import tpu as pltpu

HIDDEN = 256
LOG_SIG_MIN = -20.0
LOG_SIG_MAX = 2.0


def _round_up(n, m):
    return ((n + m - 1) // m) * m


# --------------------------------------------------------------------------
# Kernel
# --------------------------------------------------------------------------
def _actor_kernel(x_ref, w1_ref, b1_ref, wm_ref, bm_ref, ws_ref, bs_ref,
                  mean_ref, log_std_ref):
    # Cast x to the matmul dtype in-register (free VPU cast; no wrapper pass).
    x = x_ref[...].astype(w1_ref.dtype)

    # linear1 + ReLU: MXU matmul, f32 accumulation, f32 elementwise epilogue.
    h = jnp.dot(x, w1_ref[...], preferred_element_type=jnp.float32)
    h = jnp.maximum(h + b1_ref[...], 0.0)
    h = h.astype(wm_ref.dtype)

    # Two small head matmuls against resident weights (no lane slicing,
    # no lane-padded writeback); K=256 so the extra MXU push is negligible.
    mean = jnp.dot(h, wm_ref[...], preferred_element_type=jnp.float32) + bm_ref[...]
    log_std = jnp.dot(h, ws_ref[...], preferred_element_type=jnp.float32) + bs_ref[...]

    mean_ref[...] = mean.astype(mean_ref.dtype)
    log_std_ref[...] = jnp.clip(log_std, LOG_SIG_MIN, LOG_SIG_MAX).astype(log_std_ref.dtype)


# --------------------------------------------------------------------------
# One-time parameter preparation (hoisted out of the per-call path)
# --------------------------------------------------------------------------
def prepare_params(params, use_bf16=True):
    """Cast weights once. Weights are [in_features, out_features]; biases [1, f]."""
    mm_dtype = jnp.bfloat16 if use_bf16 else jnp.float32
    return {
        "w1": params["w1"].astype(mm_dtype),
        "b1": params["b1"].astype(jnp.float32),
        "wm": params["wm"].astype(mm_dtype),
        "bm": params["bm"].astype(jnp.float32),
        "ws": params["ws"].astype(mm_dtype),
        "bs": params["bs"].astype(jnp.float32),
    }


# --------------------------------------------------------------------------
# Forward
# --------------------------------------------------------------------------
def _choose_block_b(B, inp, out, max_block_b):
    # VMEM guard (conservative): per-row bytes held in VMEM =
    #   double-buffered bf16 x tile + f32 hidden + 2 double-buffered f32 outputs.
    bytes_per_row = 2 * (2 * inp) + 4 * HIDDEN + 2 * 2 * (4 * out)
    budget = 20 * 1024 * 1024  # leave headroom under the 32 MiB scoped limit
    vmem_cap = max(8, (budget // bytes_per_row) // 8 * 8)
    cap = min(max_block_b, vmem_cap)
    if B <= 2 * 256:
        block_b = _round_up(B, 8)                 # single grid step
    else:
        # >= 2 grid steps so both v7x TensorCores get work; multiple of 256
        # keeps the MXU rows full.
        block_b = _round_up(pl.cdiv(B, 2), 256)
    return max(8, min(block_b, cap))
    # TODO(synk): for very large `inp`, add a K grid axis ("arbitrary") with an
    # f32 VMEM accumulator instead of keeping W1 fully resident.


@functools.partial(jax.jit, static_argnames=("max_block_b",))
def rho_actor_deepset_forward(x, prepped, *, max_block_b=1024):
    """x: [B, inp] float32. prepped: output of prepare_params.
    Returns (mean, log_std), both float32 [B, out]."""
    B, inp = x.shape
    out = prepped["wm"].shape[1]

    block_b = _choose_block_b(B, inp, out, max_block_b)
    grid = (pl.cdiv(B, block_b),)   # ragged last block handled by Pallas

    mean, log_std = pl.pallas_call(
        _actor_kernel,
        out_shape=(
            jax.ShapeDtypeStruct((B, out), jnp.float32),
            jax.ShapeDtypeStruct((B, out), jnp.float32),
        ),
        grid=grid,
        in_specs=[
            pl.BlockSpec((block_b, inp), lambda i: (i, 0)),    # x (batch-tiled, f32)
            pl.BlockSpec((inp, HIDDEN), lambda i: (0, 0)),     # w1 (resident)
            pl.BlockSpec((1, HIDDEN), lambda i: (0, 0)),       # b1
            pl.BlockSpec((HIDDEN, out), lambda i: (0, 0)),     # wm
            pl.BlockSpec((1, out), lambda i: (0, 0)),          # bm
            pl.BlockSpec((HIDDEN, out), lambda i: (0, 0)),     # ws
            pl.BlockSpec((1, out), lambda i: (0, 0)),          # bs
        ],
        out_specs=(
            pl.BlockSpec((block_b, out), lambda i: (i, 0)),    # mean
            pl.BlockSpec((block_b, out), lambda i: (i, 0)),    # log_std
        ),
        compiler_params=pltpu.CompilerParams(
            dimension_semantics=("parallel",),                 # megacore-shardable
            vmem_limit_bytes=32 * 1024 * 1024,
        ),
    )(x, prepped["w1"], prepped["b1"], prepped["wm"], prepped["bm"],
      prepped["ws"], prepped["bs"])

    return mean, log_std


# --------------------------------------------------------------------------
# Init / reference (pure JAX)
# --------------------------------------------------------------------------
def _xavier_uniform(key, fan_in, fan_out):
    # matches torch.nn.init.xavier_uniform_ with gain=1
    limit = jnp.sqrt(6.0 / (fan_in + fan_out))
    # stored as [fan_in, fan_out] (transposed vs. PyTorch's [out, in])
    return jax.random.uniform(key, (fan_in, fan_out), jnp.float32, -limit, limit)


def init_params(key, inp, out):
    k1, k2, k3 = jax.random.split(key, 3)
    return {
        "w1": _xavier_uniform(k1, inp, HIDDEN),
        "b1": jnp.zeros((1, HIDDEN), jnp.float32),
        "wm": _xavier_uniform(k2, HIDDEN, out),
        "bm": jnp.zeros((1, out), jnp.float32),
        "ws": _xavier_uniform(k3, HIDDEN, out),
        "bs": jnp.zeros((1, out), jnp.float32),
    }


def _reference_forward(x, params):
    h = jax.nn.relu(x @ params["w1"] + params["b1"])
    mean = h @ params["wm"] + params["bm"]
    log_std = jnp.clip(h @ params["ws"] + params["bs"], LOG_SIG_MIN, LOG_SIG_MAX)
    return mean, log_std


if __name__ == "__main__":
    key = jax.random.PRNGKey(0)
    k_param, k_x = jax.random.split(key)

    B, INP, OUT = 8, 32, 8          # small shapes consistent with the module
    params = init_params(k_param, INP, OUT)
    x = jax.random.normal(k_x, (B, INP), jnp.float32)

    ref_mean, ref_log_std = _reference_forward(x, params)

    # default (bf16 matmul inputs, f32 accumulate) path — loose tolerance
    prepped_bf16 = prepare_params(params, use_bf16=True)
    mean, log_std = rho_actor_deepset_forward(x, prepped_bf16)
    jax.block_until_ready((mean, log_std))
    assert mean.shape == (B, OUT) and log_std.shape == (B, OUT)
    assert jnp.allclose(mean, ref_mean, atol=2e-2, rtol=2e-2)
    assert jnp.allclose(log_std, ref_log_std, atol=2e-2, rtol=2e-2)

    # full-f32 path — tight tolerance
    prepped_f32 = prepare_params(params, use_bf16=False)
    mean32, log_std32 = rho_actor_deepset_forward(x, prepped_f32)
    jax.block_until_ready((mean32, log_std32))
    assert jnp.allclose(mean32, ref_mean, atol=1e-5, rtol=1e-5)
    assert jnp.allclose(log_std32, ref_log_std, atol=1e-5, rtol=1e-5)

    # ragged-batch path (B not a multiple of the block) — exercises cdiv grid
    B2 = 300
    x2 = jax.random.normal(jax.random.PRNGKey(1), (B2, INP), jnp.float32)
    m2, s2 = rho_actor_deepset_forward(x2, prepped_f32)
    jax.block_until_ready((m2, s2))
    rm2, rs2 = _reference_forward(x2, params)
    assert jnp.allclose(m2, rm2, atol=1e-5, rtol=1e-5)
    assert jnp.allclose(s2, rs2, atol=1e-5, rtol=1e-5)

    print("KERNEL_OK")
</pallas_src>

<mosaic_0001>
module attributes {stable_mosaic.version = 11 : i64} {
  func.func @_actor_kernel(%arg0: i32, %arg1: memref<8x32xf32, #tpu.memory_space<vmem>>, %arg2: memref<32x256xbf16, #tpu.memory_space<vmem>>, %arg3: memref<1x256xf32, #tpu.memory_space<vmem>>, %arg4: memref<256x8xbf16, #tpu.memory_space<vmem>>, %arg5: memref<1x8xf32, #tpu.memory_space<vmem>>, %arg6: memref<256x8xbf16, #tpu.memory_space<vmem>>, %arg7: memref<1x8xf32, #tpu.memory_space<vmem>>, %arg8: memref<8x8xf32, #tpu.memory_space<vmem>>, %arg9: memref<8x8xf32, #tpu.memory_space<vmem>>) attributes {dimension_semantics = [#tpu.dimension_semantics<parallel>], iteration_bounds = array<i64: 1>, scalar_prefetch = 0 : i64, scratch_operands = 0 : i64, tpu.core_type = #tpu.core_type<tc>, window_params = [{transform_indices = @transform_0, window_bounds = array<i64: 8, 32>}, {pipeline_mode = #tpu.pipeline_mode<synchronous>, transform_indices = @transform_1, window_bounds = array<i64: 32, 256>}, {pipeline_mode = #tpu.pipeline_mode<synchronous>, transform_indices = @transform_2, window_bounds = array<i64: 1, 256>}, {pipeline_mode = #tpu.pipeline_mode<synchronous>, transform_indices = @transform_3, window_bounds = array<i64: 256, 8>}, {pipeline_mode = #tpu.pipeline_mode<synchronous>, transform_indices = @transform_4, window_bounds = array<i64: 1, 8>}, {pipeline_mode = #tpu.pipeline_mode<synchronous>, transform_indices = @transform_5, window_bounds = array<i64: 256, 8>}, {pipeline_mode = #tpu.pipeline_mode<synchronous>, transform_indices = @transform_6, window_bounds = array<i64: 1, 8>}, {transform_indices = @transform_7, window_bounds = array<i64: 8, 8>}, {transform_indices = @transform_8, window_bounds = array<i64: 8, 8>}]} {
    %c0 = arith.constant 0 : index
    %c0_0 = arith.constant 0 : index
    %0 = vector.load %arg1[%c0, %c0_0] : memref<8x32xf32, #tpu.memory_space<vmem>>, vector<8x32xf32>
    %1 = arith.truncf %0 : vector<8x32xf32> to vector<8x32xbf16>
    %c0_1 = arith.constant 0 : index
    %c0_2 = arith.constant 0 : index
    %2 = vector.load %arg2[%c0_1, %c0_2] : memref<32x256xbf16, #tpu.memory_space<vmem>>, vector<32x256xbf16>
    %cst = arith.constant dense<0.000000e+00> : vector<8x256xf32>
    %3 = tpu.matmul %1, %2, %cst {dimension_numbers = #tpu.dot_dimension_numbers<[1], [0], [0], [1], [0, 0, 1, 1], [], []>} : vector<8x32xbf16>, vector<32x256xbf16>, vector<8x256xf32> -> vector<8x256xf32>
    %c0_3 = arith.constant 0 : index
    %c0_4 = arith.constant 0 : index
    %4 = vector.load %arg3[%c0_3, %c0_4] : memref<1x256xf32, #tpu.memory_space<vmem>>, vector<1x256xf32>
    %5 = vector.broadcast %4 : vector<1x256xf32> to vector<8x256xf32>
    %6 = arith.addf %3, %5 : vector<8x256xf32>
    %cst_5 = arith.constant 0.000000e+00 : f32
    %7 = vector.broadcast %cst_5 : f32 to vector<8x256xf32>
    %8 = arith.maximumf %6, %7 : vector<8x256xf32>
    %9 = arith.truncf %8 : vector<8x256xf32> to vector<8x256xbf16>
    %c0_6 = arith.constant 0 : index
    %c0_7 = arith.constant 0 : index
    %10 = vector.load %arg4[%c0_6, %c0_7] : memref<256x8xbf16, #tpu.memory_space<vmem>>, vector<256x8xbf16>
    %cst_8 = arith.constant dense<0.000000e+00> : vector<8x8xf32>
    %11 = tpu.matmul %9, %10, %cst_8 {dimension_numbers = #tpu.dot_dimension_numbers<[1], [0], [0], [1], [0, 0, 1, 1], [], []>} : vector<8x256xbf16>, vector<256x8xbf16>, vector<8x8xf32> -> vector<8x8xf32>
    %c0_9 = arith.constant 0 : index
    %c0_10 = arith.constant 0 : index
    %12 = vector.load %arg5[%c0_9, %c0_10] : memref<1x8xf32, #tpu.memory_space<vmem>>, vector<1x8xf32>
    %13 = vector.broadcast %12 : vector<1x8xf32> to vector<8x8xf32>
    %14 = arith.addf %11, %13 : vector<8x8xf32>
    %c0_11 = arith.constant 0 : index
    %c0_12 = arith.constant 0 : index
    %15 = vector.load %arg6[%c0_11, %c0_12] : memref<256x8xbf16, #tpu.memory_space<vmem>>, vector<256x8xbf16>
    %cst_13 = arith.constant dense<0.000000e+00> : vector<8x8xf32>
    %16 = tpu.matmul %9, %15, %cst_13 {dimension_numbers = #tpu.dot_dimension_numbers<[1], [0], [0], [1], [0, 0, 1, 1], [], []>} : vector<8x256xbf16>, vector<256x8xbf16>, vector<8x8xf32> -> vector<8x8xf32>
    %c0_14 = arith.constant 0 : index
    %c0_15 = arith.constant 0 : index
    %17 = vector.load %arg7[%c0_14, %c0_15] : memref<1x8xf32, #tpu.memory_space<vmem>>, vector<1x8xf32>
    %18 = vector.broadcast %17 : vector<1x8xf32> to vector<8x8xf32>
    %19 = arith.addf %16, %18 : vector<8x8xf32>
    %c0_16 = arith.constant 0 : index
    %c0_17 = arith.constant 0 : index
    %20 = vector.load %arg8[%c0_16, %c0_17] : memref<8x8xf32, #tpu.memory_space<vmem>>, vector<8x8xf32>
    tpu.vector_store %arg8[%c0_16, %c0_17], %14 {strides = array<i32>} : memref<8x8xf32, #tpu.memory_space<vmem>>, vector<8x8xf32>,
    %cst_18 = arith.constant -2.000000e+01 : f32
    %cst_19 = arith.constant 2.000000e+00 : f32
    %21 = vector.broadcast %cst_18 : f32 to vector<8x8xf32>
    %22 = arith.maximumf %21, %19 : vector<8x8xf32>
    %23 = vector.broadcast %cst_19 : f32 to vector<8x8xf32>
    %24 = arith.minimumf %23, %22 : vector<8x8xf32>
    %c0_20 = arith.constant 0 : index
    %c0_21 = arith.constant 0 : index
    %25 = vector.load %arg9[%c0_20, %c0_21] : memref<8x8xf32, #tpu.memory_space<vmem>>, vector<8x8xf32>
    tpu.vector_store %arg9[%c0_20, %c0_21], %24 {strides = array<i32>} : memref<8x8xf32, #tpu.memory_space<vmem>>, vector<8x8xf32>,
    return
  }
  func.func @transform_0(%arg0: i32) -> (i32, i32) {
    %c0_i32 = arith.constant 0 : i32
    %c0_i32_0 = arith.constant 0 : i32
    return %arg0, %c0_i32 : i32, i32
  }
  func.func @transform_1(%arg0: i32) -> (i32, i32) {
    %c0_i32 = arith.constant 0 : i32
    %c0_i32_0 = arith.constant 0 : i32
    %c0_i32_1 = arith.constant 0 : i32
    return %c0_i32, %c0_i32_0 : i32, i32
  }
  func.func @transform_2(%arg0: i32) -> (i32, i32) {
    %c0_i32 = arith.constant 0 : i32
    %c0_i32_0 = arith.constant 0 : i32
    %c0_i32_1 = arith.constant 0 : i32
    return %c0_i32, %c0_i32_0 : i32, i32
  }
  func.func @transform_3(%arg0: i32) -> (i32, i32) {
    %c0_i32 = arith.constant 0 : i32
    %c0_i32_0 = arith.constant 0 : i32
    %c0_i32_1 = arith.constant 0 : i32
    return %c0_i32, %c0_i32_0 : i32, i32
  }
  func.func @transform_4(%arg0: i32) -> (i32, i32) {
    %c0_i32 = arith.constant 0 : i32
    %c0_i32_0 = arith.constant 0 : i32
    %c0_i32_1 = arith.constant 0 : i32
    return %c0_i32, %c0_i32_0 : i32, i32
  }
  func.func @transform_5(%arg0: i32) -> (i32, i32) {
    %c0_i32 = arith.constant 0 : i32
    %c0_i32_0 = arith.constant 0 : i32
    %c0_i32_1 = arith.constant 0 : i32
    return %c0_i32, %c0_i32_0 : i32, i32
  }
  func.func @transform_6(%arg0: i32) -> (i32, i32) {
    %c0_i32 = arith.constant 0 : i32
    %c0_i32_0 = arith.constant 0 : i32
    %c0_i32_1 = arith.constant 0 : i32
    return %c0_i32, %c0_i32_0 : i32, i32
  }
  func.func @transform_7(%arg0: i32) -> (i32, i32) {
    %c0_i32 = arith.constant 0 : i32
    %c0_i32_0 = arith.constant 0 : i32
    return %arg0, %c0_i32 : i32, i32
  }
  func.func @transform_8(%arg0: i32) -> (i32, i32) {
    %c0_i32 = arith.constant 0 : i32
    %c0_i32_0 = arith.constant 0 : i32
    return %arg0, %c0_i32 : i32, i32
  }
}

</mosaic_0001>

<llo_original>
// kernel: rho_actor_deepset_forward.1
$region0: #{rho_actor_deepset_forward.1}
  #allocation0 [shape = 'u32[]', space=smem, size = 0x4, offset = 0x4, fixed_abs, tag = 'smem constant byte address 0x4 - core index']
  #allocation1 [shape = 'u32[72,128]{1,0:T(1,128)}', space=vmem, size = 0x9000, scoped, tag = 'internal scratch']
  %s0 = inlined_call_operand.vmem [shape: f32[8,32], index: 0, kind: input, shape index: {}]
  %s1 = inlined_call_operand.vmem [shape: bf16[32,256], index: 1, kind: input, shape index: {}]
  %s2 = inlined_call_operand.vmem [shape: f32[1,256], index: 2, kind: input, shape index: {}]
  %s3 = inlined_call_operand.vmem [shape: bf16[256,8], index: 3, kind: input, shape index: {}]
  %s4 = inlined_call_operand.vmem [shape: f32[1,8], index: 4, kind: input, shape index: {}]
  %s5 = inlined_call_operand.vmem [shape: bf16[256,8], index: 5, kind: input, shape index: {}]
  %s6 = inlined_call_operand.vmem [shape: f32[1,8], index: 6, kind: input, shape index: {}]
  %s7 = inlined_call_operand.hbm [shape: f32[8,8], index: 7, kind: output, shape index: {0}]
  %s8 = inlined_call_operand.hbm [shape: f32[8,8], index: 8, kind: output, shape index: {1}]
  %9 = xla_tuple %s7, %s8
  %s10 = sld [smem:[#allocation0]]
  $region46: #{rho_actor_deepset_forward.1} parent=0
    _
  %s12 = ssub.s32 1, %s10
  %s13 = scalar_select 0, %s12, %s10
  $region1: #{rho_actor_deepset_forward.1} parent=0
    #allocation2 [shape = 'u8[4096]{0}', space=vmem, size = 0x1000, scoped, tag = 'output window, operand 0, single buffered']
    #allocation3 [shape = 's32[1]{0}', space=sflag, size = 0x4, scoped, tag = 'scoped memory for rho_actor_deepset_forward.1']
    #allocation4 [shape = 'u8[4096]{0}', space=vmem, size = 0x1000, scoped, tag = 'output window, operand 1, single buffered']
    #allocation5 [shape = 's32[1]{0}', space=sflag, size = 0x4, scoped, tag = 'scoped memory for rho_actor_deepset_forward.1']
    %14 = vsyncpa [#allocation3], 0
    %15 = vsyncpa [#allocation5], 0
    // Predicated region
    $region2: #{rho_actor_deepset_forward.1} parent=1 // pred_check
      _
    $region3: #{rho_actor_deepset_forward.1} parent=1 // pred_check_branch
      %17 = sbr.rel (0) target = $region5
    $region4: #{rho_actor_deepset_forward.1} parent=1 // pred_region
      _
    $region5: #{rho_actor_deepset_forward.1} parent=1 // pred_fallthru
      _
    // Predicated region
    $region6: #{rho_actor_deepset_forward.1} parent=1 // pred_check
      _
    $region7: #{rho_actor_deepset_forward.1} parent=1 // pred_check_branch
      %19 = sbr.rel (0) target = $region9
    $region8: #{rho_actor_deepset_forward.1} parent=1 // pred_region
      _
    $region9: #{rho_actor_deepset_forward.1} parent=1 // pred_fallthru
      _
    // Predicated region
    $region10: #{rho_actor_deepset_forward.1} parent=1 // pred_check
      _
    $region11: #{rho_actor_deepset_forward.1} parent=1 // pred_check_branch
      %21 = sbr.rel (0) target = $region13
    $region12: #{rho_actor_deepset_forward.1} parent=1 // pred_region
      _
    $region13: #{rho_actor_deepset_forward.1} parent=1 // pred_fallthru
      _
    // Predicated region
    $region14: #{rho_actor_deepset_forward.1} parent=1 // pred_check
      _
    $region15: #{rho_actor_deepset_forward.1} parent=1 // pred_check_branch
      %23 = sbr.rel (0) target = $region17
    $region16: #{rho_actor_deepset_forward.1} parent=1 // pred_region
      _
    $region17: #{rho_actor_deepset_forward.1} parent=1 // pred_fallthru
      _
    // Predicated region
    $region18: #{rho_actor_deepset_forward.1} parent=1 // pred_check
      _
    $region19: #{rho_actor_deepset_forward.1} parent=1 // pred_check_branch
      %25 = sbr.rel (0) target = $region21
    $region20: #{rho_actor_deepset_forward.1} parent=1 // pred_region
      _
    $region21: #{rho_actor_deepset_forward.1} parent=1 // pred_fallthru
      _
    // Predicated region
    $region22: #{rho_actor_deepset_forward.1} parent=1 // pred_check
      _
    $region23: #{rho_actor_deepset_forward.1} parent=1 // pred_check_branch
      %27 = sbr.rel (0) target = $region25
    $region24: #{rho_actor_deepset_forward.1} parent=1 // pred_region
      _
    $region25: #{rho_actor_deepset_forward.1} parent=1 // pred_fallthru
      _
    // Predicated region
    $region26: #{rho_actor_deepset_forward.1} parent=1 // pred_check
      _
    $region27: #{rho_actor_deepset_forward.1} parent=1 // pred_check_branch
      %29 = sbr.rel (0) target = $region29
    $region28: #{rho_actor_deepset_forward.1} parent=1 // pred_region
      _
    $region29: #{rho_actor_deepset_forward.1} parent=1 // pred_fallthru
      _
    %v31 = vld [vmem:[%s0] sm:$0xff]
    %v32 = vpack.c.bf16 %v31, %v31
    %v33 = vld [vmem:[%s1] sm:$0xff]
    %v34 = vld [vmem:[%s1 + $0x8] sm:$0xff]
    %v35 = vld [vmem:[%s1 + $0x10] sm:$0xff]
    %v36 = vld [vmem:[%s1 + $0x18] sm:$0xff]
    %v37 = vld [vmem:[%s2] sm:$0x3]
    %v39 = vperm.slane %v37, 0
    %v40 = vperm.slane %v37, 1
    %v47 = vunpack.c.l.b16 %v33
    %v48 = vunpack.c.h.b16 %v33
    %v49 = vunpack.c.l.b16 %v34
    %v50 = vunpack.c.h.b16 %v34
    %v51 = vunpack.c.l.b16 %v35
    %v52 = vunpack.c.h.b16 %v35
    %v53 = vunpack.c.l.b16 %v36
    %v54 = vunpack.c.h.b16 %v36
    %v55 = vpack.c.b16 %v49, %v47
    %v56 = vpack.c.b16 %v50, %v48
    %v57 = vpack.c.b16 %v53, %v51
    %v58 = vpack.c.b16 %v54, %v52
    %vm63 = vcmask 261120
    %v65 = vsel %vm63, %v32, 0
    %67 = vmatpush.bf16.msra.mxu0 0
    %68 = vmatpush.bf16.msra.mxu0 0
    %69 = vmatpush.bf16.msra.mxu0 0
    %70 = vmatpush.bf16.msra.mxu0 0
    %71 = vmatpush.bf16.msra.mxu0 0
    %72 = vmatpush.bf16.msra.mxu0 0
    %73 = vmatpush.bf16.msra.mxu0 %v57
    %74 = vmatpush.bf16.msra.mxu0 %v55
    %75 = vmatmul.bf16.gmra.mxu0 %v65
    %v76 = vpop.f32.mrf.mxu0
    %v77 = vadd.f32 %v39, %v76
    %v78 = vpop.f32.mrf.mxu0
    %79 = vdwg.mxu0
    %80 = vmatpush.bf16.msra.mxu0 0
    %81 = vmatpush.bf16.msra.mxu0 0
    %82 = vmatpush.bf16.msra.mxu0 0
    %83 = vmatpush.bf16.msra.mxu0 0
    %84 = vmatpush.bf16.msra.mxu0 0
    %85 = vmatpush.bf16.msra.mxu0 0
    %86 = vmatpush.bf16.msra.mxu0 %v58
    %87 = vmatpush.bf16.msra.mxu0 %v56
    %88 = vmatmul.bf16.gmra.mxu0 %v65
    %v89 = vpop.f32.mrf.mxu0
    %v90 = vadd.f32 %v40, %v89
    %v91 = vpop.f32.mrf.mxu0
    %92 = vdwg.mxu0
    %v93 = vmax.f32 %v77, 0.0
    %v94 = vmax.f32 %v90, 0.0
    %v95 = vpack.c.bf16 %v93, %v93
    %v96 = vpack.c.bf16 %v94, %v94
    %v97 = vld [vmem:[%s3] sm:$0xf]
    %v98 = vld [vmem:[%s3 + $0x4] sm:$0xf]
    %v99 = vld [vmem:[%s3 + $0x8] sm:$0xf]
    %v100 = vld [vmem:[%s3 + $0xc] sm:$0xf]
    %v101 = vld [vmem:[%s3 + $0x10] sm:$0xf]
    %v102 = vld [vmem:[%s3 + $0x14] sm:$0xf]
    %v103 = vld [vmem:[%s3 + $0x18] sm:$0xf]
    %v104 = vld [vmem:[%s3 + $0x1c] sm:$0xf]
    %v105 = vld [vmem:[%s3 + $0x20] sm:$0xf]
    %v106 = vld [vmem:[%s3 + $0x24] sm:$0xf]
    %v107 = vld [vmem:[%s3 + $0x28] sm:$0xf]
    %v108 = vld [vmem:[%s3 + $0x2c] sm:$0xf]
    %v109 = vld [vmem:[%s3 + $0x30] sm:$0xf]
    %v110 = vld [vmem:[%s3 + $0x34] sm:$0xf]
    %v111 = vld [vmem:[%s3 + $0x38] sm:$0xf]
    %v112 = vld [vmem:[%s3 + $0x3c] sm:$0xf]
    %v113 = vld [vmem:[%s3 + $0x40] sm:$0xf]
    %v114 = vld [vmem:[%s3 + $0x44] sm:$0xf]
    %v115 = vld [vmem:[%s3 + $0x48] sm:$0xf]
    %v116 = vld [vmem:[%s3 + $0x4c] sm:$0xf]
    %v117 = vld [vmem:[%s3 + $0x50] sm:$0xf]
    %v118 = vld [vmem:[%s3 + $0x54] sm:$0xf]
    %v119 = vld [vmem:[%s3 + $0x58] sm:$0xf]
    %v120 = vld [vmem:[%s3 + $0x5c] sm:$0xf]
    %v121 = vld [vmem:[%s3 + $0x60] sm:$0xf]
    %v122 = vld [vmem:[%s3 + $0x64] sm:$0xf]
    %v123 = vld [vmem:[%s3 + $0x68] sm:$0xf]
    %v124 = vld [vmem:[%s3 + $0x6c] sm:$0xf]
    %v125 = vld [vmem:[%s3 + $0x70] sm:$0xf]
    %v126 = vld [vmem:[%s3 + $0x74] sm:$0xf]
    %v127 = vld [vmem:[%s3 + $0x78] sm:$0xf]
    %v128 = vld [vmem:[%s3 + $0x7c] sm:$0xf]
    %v129 = vld [vmem:[%s4] sm:$0x1]
    %v131 = vperm.slane %v129, 0
    %v165 = vunpack.c.l.b16 %v97
    %v166 = vunpack.c.l.b16 %v98
    %v167 = vunpack.c.l.b16 %v99
    %v168 = vunpack.c.l.b16 %v100
    %v169 = vunpack.c.l.b16 %v101
    %v170 = vunpack.c.l.b16 %v102
    %v171 = vunpack.c.l.b16 %v103
    %v172 = vunpack.c.l.b16 %v104
    %v173 = vunpack.c.l.b16 %v105
    %v174 = vunpack.c.l.b16 %v106
    %v175 = vunpack.c.l.b16 %v107
    %v176 = vunpack.c.l.b16 %v108
    %v177 = vunpack.c.l.b16 %v109
    %v178 = vunpack.c.l.b16 %v110
    %v179 = vunpack.c.l.b16 %v111
    %v180 = vunpack.c.l.b16 %v112
    %v181 = vunpack.c.l.b16 %v113
    %v182 = vunpack.c.l.b16 %v114
    %v183 = vunpack.c.l.b16 %v115
    %v184 = vunpack.c.l.b16 %v116
    %v185 = vunpack.c.l.b16 %v117
    %v186 = vunpack.c.l.b16 %v118
    %v187 = vunpack.c.l.b16 %v119
    %v188 = vunpack.c.l.b16 %v120
    %v189 = vunpack.c.l.b16 %v121
    %v190 = vunpack.c.l.b16 %v122
    %v191 = vunpack.c.l.b16 %v123
    %v192 = vunpack.c.l.b16 %v124
    %v193 = vunpack.c.l.b16 %v125
    %v194 = vunpack.c.l.b16 %v126
    %v195 = vunpack.c.l.b16 %v127
    %v196 = vunpack.c.l.b16 %v128
    %v197 = vpack.c.b16 %v166, %v165
    %v198 = vpack.c.b16 %v168, %v167
    %v199 = vpack.c.b16 %v170, %v169
    %v200 = vpack.c.b16 %v172, %v171
    %v201 = vpack.c.b16 %v174, %v173
    %v202 = vpack.c.b16 %v176, %v175
    %v203 = vpack.c.b16 %v178, %v177
    %v204 = vpack.c.b16 %v180, %v179
    %v205 = vpack.c.b16 %v182, %v181
    %v206 = vpack.c.b16 %v184, %v183
    %v207 = vpack.c.b16 %v186, %v185
    %v208 = vpack.c.b16 %v188, %v187
    %v209 = vpack.c.b16 %v190, %v189
    %v210 = vpack.c.b16 %v192, %v191
    %v211 = vpack.c.b16 %v194, %v193
    %v212 = vpack.c.b16 %v196, %v195
    %229 = vmatpush.bf16.msra.mxu0 %v204
    %230 = vmatpush.bf16.msra.mxu0 %v203
    %231 = vmatpush.bf16.msra.mxu0 %v202
    %232 = vmatpush.bf16.msra.mxu0 %v201
    %233 = vmatpush.bf16.msra.mxu0 %v200
    %234 = vmatpush.bf16.msra.mxu0 %v199
    %235 = vmatpush.bf16.msra.mxu0 %v198
    %236 = vmatpush.bf16.msra.mxu0 %v197
    %237 = vmatmul.bf16.gmra.mxu0 %v95
    %v238 = vpop.f32.mrf.mxu0
    %v239 = vadd.f32 %v131, %v238
    %v240 = vpop.f32.mrf.mxu0
    %241 = vdwg.mxu0
    %242 = vmatpush.bf16.msra.mxu0 %v212
    %243 = vmatpush.bf16.msra.mxu0 %v211
    %244 = vmatpush.bf16.msra.mxu0 %v210
    %245 = vmatpush.bf16.msra.mxu0 %v209
    %246 = vmatpush.bf16.msra.mxu0 %v208
    %247 = vmatpush.bf16.msra.mxu0 %v207
    %248 = vmatpush.bf16.msra.mxu0 %v206
    %249 = vmatpush.bf16.msra.mxu0 %v205
    %250 = vmatmul.bf16.gmra.mxu0 %v96
    %v251 = vpop.f32.mrf.mxu0
    %v252 = vadd.f32 %v239, %v251
    %v253 = vpop.f32.mrf.mxu0
    %254 = vdwg.mxu0
    %v255 = vld [vmem:[%s5] sm:$0xf]
    %v256 = vld [vmem:[%s5 + $0x4] sm:$0xf]
    %v257 = vld [vmem:[%s5 + $0x8] sm:$0xf]
    %v258 = vld [vmem:[%s5 + $0xc] sm:$0xf]
    %v259 = vld [vmem:[%s5 + $0x10] sm:$0xf]
    %v260 = vld [vmem:[%s5 + $0x14] sm:$0xf]
    %v261 = vld [vmem:[%s5 + $0x18] sm:$0xf]
    %v262 = vld [vmem:[%s5 + $0x1c] sm:$0xf]
    %v263 = vld [vmem:[%s5 + $0x20] sm:$0xf]
    %v264 = vld [vmem:[%s5 + $0x24] sm:$0xf]
    %v265 = vld [vmem:[%s5 + $0x28] sm:$0xf]
    %v266 = vld [vmem:[%s5 + $0x2c] sm:$0xf]
    %v267 = vld [vmem:[%s5 + $0x30] sm:$0xf]
    %v268 = vld [vmem:[%s5 + $0x34] sm:$0xf]
    %v269 = vld [vmem:[%s5 + $0x38] sm:$0xf]
    %v270 = vld [vmem:[%s5 + $0x3c] sm:$0xf]
    %v271 = vld [vmem:[%s5 + $0x40] sm:$0xf]
    %v272 = vld [vmem:[%s5 + $0x44] sm:$0xf]
    %v273 = vld [vmem:[%s5 + $0x48] sm:$0xf]
    %v274 = vld [vmem:[%s5 + $0x4c] sm:$0xf]
    %v275 = vld [vmem:[%s5 + $0x50] sm:$0xf]
    %v276 = vld [vmem:[%s5 + $0x54] sm:$0xf]
    %v277 = vld [vmem:[%s5 + $0x58] sm:$0xf]
    %v278 = vld [vmem:[%s5 + $0x5c] sm:$0xf]
    %v279 = vld [vmem:[%s5 + $0x60] sm:$0xf]
    %v280 = vld [vmem:[%s5 + $0x64] sm:$0xf]
    %v281 = vld [vmem:[%s5 + $0x68] sm:$0xf]
    %v282 = vld [vmem:[%s5 + $0x6c] sm:$0xf]
    %v283 = vld [vmem:[%s5 + $0x70] sm:$0xf]
    %v284 = vld [vmem:[%s5 + $0x74] sm:$0xf]
    %v285 = vld [vmem:[%s5 + $0x78] sm:$0xf]
    %v286 = vld [vmem:[%s5 + $0x7c] sm:$0xf]
    %v287 = vld [vmem:[%s6] sm:$0x1]
    %v289 = vperm.slane %v287, 0
    %v323 = vunpack.c.l.b16 %v255
    %v324 = vunpack.c.l.b16 %v256
    %v325 = vunpack.c.l.b16 %v257
    %v326 = vunpack.c.l.b16 %v258
    %v327 = vunpack.c.l.b16 %v259
    %v328 = vunpack.c.l.b16 %v260
    %v329 = vunpack.c.l.b16 %v261
    %v330 = vunpack.c.l.b16 %v262
    %v331 = vunpack.c.l.b16 %v263
    %v332 = vunpack.c.l.b16 %v264
    %v333 = vunpack.c.l.b16 %v265
    %v334 = vunpack.c.l.b16 %v266
    %v335 = vunpack.c.l.b16 %v267
    %v336 = vunpack.c.l.b16 %v268
    %v337 = vunpack.c.l.b16 %v269
    %v338 = vunpack.c.l.b16 %v270
    %v339 = vunpack.c.l.b16 %v271
    %v340 = vunpack.c.l.b16 %v272
    %v341 = vunpack.c.l.b16 %v273
    %v342 = vunpack.c.l.b16 %v274
    %v343 = vunpack.c.l.b16 %v275
    %v344 = vunpack.c.l.b16 %v276
    %v345 = vunpack.c.l.b16 %v277
    %v346 = vunpack.c.l.b16 %v278
    %v347 = vunpack.c.l.b16 %v279
    %v348 = vunpack.c.l.b16 %v280
    %v349 = vunpack.c.l.b16 %v281
    %v350 = vunpack.c.l.b16 %v282
    %v351 = vunpack.c.l.b16 %v283
    %v352 = vunpack.c.l.b16 %v284
    %v353 = vunpack.c.l.b16 %v285
    %v354 = vunpack.c.l.b16 %v286
    %v355 = vpack.c.b16 %v324, %v323
    %v356 = vpack.c.b16 %v326, %v325
    %v357 = vpack.c.b16 %v328, %v327
    %v358 = vpack.c.b16 %v330, %v329
    %v359 = vpack.c.b16 %v332, %v331
    %v360 = vpack.c.b16 %v334, %v333
    %v361 = vpack.c.b16 %v336, %v335
    %v362 = vpack.c.b16 %v338, %v337
    %v363 = vpack.c.b16 %v340, %v339
    %v364 = vpack.c.b16 %v342, %v341
    %v365 = vpack.c.b16 %v344, %v343
    %v366 = vpack.c.b16 %v346, %v345
    %v367 = vpack.c.b16 %v348, %v347
    %v368 = vpack.c.b16 %v350, %v349
    %v369 = vpack.c.b16 %v352, %v351
    %v370 = vpack.c.b16 %v354, %v353
    %387 = vmatpush.bf16.msra.mxu0 %v362
    %388 = vmatpush.bf16.msra.mxu0 %v361
    %389 = vmatpush.bf16.msra.mxu0 %v360
    %390 = vmatpush.bf16.msra.mxu0 %v359
    %391 = vmatpush.bf16.msra.mxu0 %v358
    %392 = vmatpush.bf16.msra.mxu0 %v357
    %393 = vmatpush.bf16.msra.mxu0 %v356
    %394 = vmatpush.bf16.msra.mxu0 %v355
    %395 = vmatmul.bf16.gmra.mxu0 %v95
    %v396 = vpop.f32.mrf.mxu0
    %v397 = vadd.f32 %v289, %v396
    %v398 = vpop.f32.mrf.mxu0
    %399 = vdwg.mxu0
    %400 = vmatpush.bf16.msra.mxu0 %v370
    %401 = vmatpush.bf16.msra.mxu0 %v369
    %402 = vmatpush.bf16.msra.mxu0 %v368
    %403 = vmatpush.bf16.msra.mxu0 %v367
    %404 = vmatpush.bf16.msra.mxu0 %v366
    %405 = vmatpush.bf16.msra.mxu0 %v365
    %406 = vmatpush.bf16.msra.mxu0 %v364
    %407 = vmatpush.bf16.msra.mxu0 %v363
    %408 = vmatmul.bf16.gmra.mxu0 %v96
    %v409 = vpop.f32.mrf.mxu0
    %v410 = vadd.f32 %v397, %v409
    %v411 = vpop.f32.mrf.mxu0
    %412 = vdwg.mxu0
    %vm413 = vcmask 64512
    %414 = vst.msk [vmem:[#allocation2] sm:$0xff] %vm413, %v252
    %v415 = vmax.f32 %v410, -20.0
    %v416 = vmin.f32 %v415, 2.0
    %417 = vst.msk [vmem:[#allocation4] sm:$0xff] %vm413, %v416
    // Predicated region
    $region30: #{rho_actor_deepset_forward.1} parent=1 // pred_check
      _
    $region31: #{rho_actor_deepset_forward.1} parent=1 // pred_check_branch
      %419 = sbr.rel (0) target = $region33
    $region32: #{rho_actor_deepset_forward.1} parent=1 // pred_region
      %421 = vsyncadd [#allocation3], 0
      %s423 = sshll.u32 [#allocation2], 4
      %s424 = int_to_ptr.vmem [resolvable:$true] %s423
      %s425 = sshll.u32 %s7, 4
      %s426 = int_to_ptr.hbm [resolvable:$true] %s425
      %428 = dma.vmem_to_hbm [thread:$0]  %s424, 128, %s426, [#allocation3]
    $region33: #{rho_actor_deepset_forward.1} parent=1 // pred_fallthru
      _
    // Predicated region
    $region34: #{rho_actor_deepset_forward.1} parent=1 // pred_check
      _
    $region35: #{rho_actor_deepset_forward.1} parent=1 // pred_check_branch
      %430 = sbr.rel (0) target = $region37
    $region36: #{rho_actor_deepset_forward.1} parent=1 // pred_region
      %432 = vsyncadd [#allocation5], 0
      %s434 = sshll.u32 [#allocation4], 4
      %s435 = int_to_ptr.vmem [resolvable:$true] %s434
      %s436 = sshll.u32 %s8, 4
      %s437 = int_to_ptr.hbm [resolvable:$true] %s436
      %439 = dma.vmem_to_hbm [thread:$0]  %s435, 128, %s437, [#allocation5]
    $region37: #{rho_actor_deepset_forward.1} parent=1 // pred_fallthru
      _
    // Predicated region
    $region38: #{rho_actor_deepset_forward.1} parent=1 // pred_check
      _
    $region39: #{rho_actor_deepset_forward.1} parent=1 // pred_check_branch
      %441 = sbr.rel (0) target = $region41
    $region40: #{rho_actor_deepset_forward.1} parent=1 // pred_region
      %443 = dma.done [#allocation3], 128
    $region41: #{rho_actor_deepset_forward.1} parent=1 // pred_fallthru
      _
    // Predicated region
    $region42: #{rho_actor_deepset_forward.1} parent=1 // pred_check
      _
    $region43: #{rho_actor_deepset_forward.1} parent=1 // pred_check_branch
      %445 = sbr.rel (0) target = $region45
    $region44: #{rho_actor_deepset_forward.1} parent=1 // pred_region
      %447 = dma.done [#allocation5], 128
    $region45: #{rho_actor_deepset_forward.1} parent=1 // pred_fallthru
      _
    %448 = vsyncpa [#allocation3], 1
    %449 = vsyncpa [#allocation5], 1

</llo_original>
